<compile_context>
chip_gen: v5e
topology: v5e:2x2
jax: 0.10.0
libtpu: 0.0.40
codegen_flags: <defaults>
</compile_context>

<pallas_src>
import functools

import numpy as np
import jax
import jax.numpy as jnp
from jax.experimental import pallas as pl
from jax.experimental.pallas import tpu as pltpu


# --------------------------------------------------------------------------- utils

def _round_up(x, m):
    return ((x + m - 1) // m) * m


_VMEM_LIMIT = 48 * 1024 * 1024   # explicit scoped-VMEM; <= 48 MiB leaves headroom on v7x
_EPS2 = 1e-24                    # (F.normalize eps = 1e-12) ** 2; rsqrt(max(ss, eps^2)) == 1/max(norm, eps)


def _pick_tm(batch, block_rows):
    """Row-block size: big tiles for bandwidth, but always >=2 row blocks when
    batch >= 16 so the v7x megacore ("parallel" row axis) has work for both TCs."""
    cap = _round_up(max(int(block_rows), 8), 8)
    if 16 <= batch <= cap:
        tm = _round_up((batch + 1) // 2, 8)
    else:
        tm = min(cap, _round_up(batch, 8))
    return max(tm, 8)


# --------------------------------------------------------------------------- kernels

def _normalize_weight_kernel(w_ref, wn_ref, wn_bf16_ref):
    # F.normalize(classification_weight, p=2, dim=0): column L2-normalize.
    # rsqrt (EUP slot) + multiply instead of sqrt + divide.
    w = w_ref[...].astype(jnp.float32)
    ss = jnp.sum(w * w, axis=0, keepdims=True)
    inv = jax.lax.rsqrt(jnp.maximum(ss, jnp.float32(_EPS2)))
    wn = w * inv
    wn_ref[...] = wn                                   # f32 module-state output
    wn_bf16_ref[...] = wn.astype(jnp.bfloat16)         # bf16 MXU operand for K2


def _clip_logits_kernel(x_ref, wn_ref, logits_ref, feat_ref, *, scale):
    # Fused: row L2-normalize (F.normalize(..., dim=1)) + scaled classifier matmul.
    # Normalization math in f32; MXU matmul in bf16 with f32 accumulation.
    x = x_ref[...].astype(jnp.float32)
    ss = jnp.sum(x * x, axis=-1, keepdims=True)
    row_inv = jax.lax.rsqrt(jnp.maximum(ss, jnp.float32(_EPS2)))
    xn = x * row_inv
    feat_ref[...] = xn.astype(feat_ref.dtype)
    # Fold the 100x logit scale into the (tm, D) operand instead of multiplying
    # the (tm, C_pad) logits tile.
    xs = (xn * jnp.float32(scale)).astype(jnp.bfloat16)
    logits_ref[...] = jnp.dot(
        xs, wn_ref[...], preferred_element_type=jnp.float32
    ).astype(logits_ref.dtype)


# --------------------------------------------------------------------------- wrapper

def clip_ln_v_forward(image_features_raw, classification_weight, *,
                      logit_scale=100.0, block_rows=512, col_block=1024):
    """Pallas implementation of CLIP_LN_V.forward()'s tensor math.

    Args:
      image_features_raw: (B, D) unnormalized backbone image features
          (bf16 or f32; bf16 halves the streamed bytes).
      classification_weight: (D, C) zero-shot class embeddings.
    Returns:
      logits (B, C) f32, image_features (B, D) f32 row-normalized,
      normalized_weight (D, C) f32 (what the reference assigns back to the module).
    """
    x = jnp.asarray(image_features_raw)
    if x.dtype != jnp.bfloat16:
        x = x.astype(jnp.float32)
    w = jnp.asarray(classification_weight, jnp.float32)

    B, D = x.shape
    D2, C = w.shape
    assert D == D2, (D, D2)

    # Lane-dense padding: C and D to 128-lane multiples (unmasked vst on both outputs).
    D_pad = _round_up(D, 128)
    tn = min(_round_up(max(C, 1), 128), _round_up(col_block, 128))
    C_pad = _round_up(max(C, 1), tn)

    tm = _pick_tm(B, block_rows)
    B_pad = _round_up(B, tm)

    x_pad = jnp.pad(x, ((0, B_pad - B), (0, D_pad - D)))
    w_pad = jnp.pad(w, ((0, D_pad - D), (0, C_pad - C)))

    # K1: column-normalize the classifier once per forward.  Emits the f32 module-state
    # weight and a bf16 copy so the logits kernel never round-trips an f32 weight.
    wn_pad, wn_bf16 = pl.pallas_call(
        _normalize_weight_kernel,
        out_shape=(
            jax.ShapeDtypeStruct((D_pad, C_pad), jnp.float32),
            jax.ShapeDtypeStruct((D_pad, C_pad), jnp.bfloat16),
        ),
        grid=(C_pad // tn,),
        in_specs=[pl.BlockSpec((D_pad, tn), lambda j: (0, j))],
        out_specs=(
            pl.BlockSpec((D_pad, tn), lambda j: (0, j)),
            pl.BlockSpec((D_pad, tn), lambda j: (0, j)),
        ),
        compiler_params=pltpu.CompilerParams(
            dimension_semantics=("parallel",),
            vmem_limit_bytes=_VMEM_LIMIT,
        ),
    )(w_pad)

    # K2: fused row-normalize + 100 * Xn @ Wn (bf16 MXU, f32 accumulate).
    grid = (B_pad // tm, C_pad // tn)
    logits_pad, feats_pad = pl.pallas_call(
        functools.partial(_clip_logits_kernel, scale=float(logit_scale)),
        out_shape=(
            jax.ShapeDtypeStruct((B_pad, C_pad), jnp.float32),
            jax.ShapeDtypeStruct((B_pad, D_pad), jnp.float32),
        ),
        grid=grid,
        in_specs=[
            pl.BlockSpec((tm, D_pad), lambda i, j: (i, 0)),   # streamed row blocks
            pl.BlockSpec((D_pad, tn), lambda i, j: (0, j)),   # bf16 weight, column-tiled
        ],
        out_specs=(
            pl.BlockSpec((tm, tn), lambda i, j: (i, j)),      # lane-dense logits
            pl.BlockSpec((tm, D_pad), lambda i, j: (i, 0)),   # normalized features
        ),
        compiler_params=pltpu.CompilerParams(
            dimension_semantics=("parallel", "arbitrary"),    # rows sharded on v7x megacore
            vmem_limit_bytes=_VMEM_LIMIT,
        ),
    )(x_pad, wn_bf16)

    logits = logits_pad[:B, :C]
    image_features = feats_pad[:B, :D]
    normalized_weight = wn_pad[:D, :C]
    return logits, image_features, normalized_weight


# --------------------------------------------------------------------------- module

class CLIP_LN_V:
    """JAX / Pallas port of the translatable part of clip/custom_clip.py::CLIP_LN_V.

    forward(features) -> (logits, image_features), where `features` are the
    unnormalized outputs of the CLIP visual backbone.
    """

    def __init__(self, classification_weight, logit_scale=100.0,
                 block_rows=512, col_block=1024):
        # TODO(synk): load() of the pretrained ViT backbone, tokenize()/encode_text()
        # prompt ensembling, and setup_parameters()'s LayerNorm/BatchNorm requires_grad
        # bookkeeping have no Pallas equivalent and are omitted; classification_weight
        # stands in for encode_text()'s output.
        self.classification_weight = jnp.asarray(classification_weight, jnp.float32)
        self.logit_scale = float(logit_scale)
        self.block_rows = int(block_rows)
        self.col_block = int(col_block)
        self.learnable_params = []

    def encode_image(self, image_features_raw):
        # Backbone runs outside this script; the F.normalize(p=2, dim=1) half of
        # encode_image() is fused into the Pallas logits kernel.
        return jnp.asarray(image_features_raw)

    def forward(self, image_features_raw):
        logits, image_features, wn = clip_ln_v_forward(
            self.encode_image(image_features_raw),
            self.classification_weight,
            logit_scale=self.logit_scale,
            block_rows=self.block_rows,
            col_block=self.col_block,
        )
        # The reference re-assigns the normalized weight to the module.
        self.classification_weight = wn
        return logits, image_features

    __call__ = forward


# --------------------------------------------------------------------------- demo

if __name__ == "__main__":
    key = jax.random.PRNGKey(0)
    k_w, k_x = jax.random.split(key)

    B, D, C = 32, 256, 10            # small shapes: batch=32, feat_dim=256, classes=10
    classification_weight = jax.random.normal(k_w, (D, C), jnp.float32)
    # Backbone features supplied in bf16 (halves the streamed bytes); the
    # normalization math still runs in f32 inside the kernel.
    image_features_raw = jax.random.normal(k_x, (B, D), jnp.float32).astype(jnp.bfloat16)

    module = CLIP_LN_V(classification_weight, logit_scale=100.0,
                       block_rows=512, col_block=1024)
    logits, image_features = module(image_features_raw)
    logits = jax.block_until_ready(logits)
    image_features = jax.block_until_ready(image_features)
    wn = jax.block_until_ready(module.classification_weight)

    # Plain-JAX/NumPy reference of the same forward math (from the same bf16 features).
    x32 = np.asarray(image_features_raw, np.float32)
    w32 = np.asarray(classification_weight, np.float32)
    wn_ref = w32 / np.maximum(np.linalg.norm(w32, axis=0, keepdims=True), 1e-12)
    xn_ref = x32 / np.maximum(np.linalg.norm(x32, axis=1, keepdims=True), 1e-12)
    logits_ref = 100.0 * xn_ref @ wn_ref

    assert logits.shape == (B, C) and image_features.shape == (B, D)
    assert wn.shape == (D, C)
    assert np.allclose(np.asarray(image_features), xn_ref, atol=1e-3, rtol=1e-3)
    assert np.allclose(np.asarray(wn), wn_ref, atol=1e-3, rtol=1e-3)
    # bf16 MXU matmul: inputs are unit vectors, so |logit error| <= 100 * 2 * 2^-9 ~= 0.4.
    assert np.allclose(np.asarray(logits), logits_ref, atol=5e-1, rtol=2e-2)

    print("KERNEL_OK")
</pallas_src>

<mosaic_0001>
module attributes {stable_mosaic.version = 11 : i64} {
  func.func @_normalize_weight_kernel(%arg0: i32, %arg1: memref<256x128xf32, #tpu.memory_space<vmem>>, %arg2: memref<256x128xf32, #tpu.memory_space<vmem>>, %arg3: memref<256x128xbf16, #tpu.memory_space<vmem>>) attributes {dimension_semantics = [#tpu.dimension_semantics<parallel>], iteration_bounds = array<i64: 1>, scalar_prefetch = 0 : i64, scratch_operands = 0 : i64, tpu.core_type = #tpu.core_type<tc>, window_params = [{transform_indices = @transform_0, window_bounds = array<i64: 256, 128>}, {transform_indices = @transform_1, window_bounds = array<i64: 256, 128>}, {transform_indices = @transform_2, window_bounds = array<i64: 256, 128>}]} {
    %c0 = arith.constant 0 : index
    %c0_0 = arith.constant 0 : index
    %0 = vector.load %arg1[%c0, %c0_0] : memref<256x128xf32, #tpu.memory_space<vmem>>, vector<256x128xf32>
    %1 = arith.mulf %0, %0 : vector<256x128xf32>
    %cst = arith.constant dense<0.000000e+00> : vector<128xf32>
    %2 = vector.multi_reduction <add>, %1, %cst [0] : vector<256x128xf32> to vector<128xf32>
    %3 = vector.shape_cast %2 : vector<128xf32> to vector<1x128xf32>
    %cst_1 = arith.constant 1.000000e-24 : f32
    %4 = vector.broadcast %cst_1 : f32 to vector<1x128xf32>
    %5 = arith.maximumf %3, %4 : vector<1x128xf32>
    %6 = math.rsqrt %5 : vector<1x128xf32>
    %7 = vector.broadcast %6 : vector<1x128xf32> to vector<256x128xf32>
    %8 = arith.mulf %0, %7 : vector<256x128xf32>
    %c0_2 = arith.constant 0 : index
    %c0_3 = arith.constant 0 : index
    %9 = vector.load %arg2[%c0_2, %c0_3] : memref<256x128xf32, #tpu.memory_space<vmem>>, vector<256x128xf32>
    tpu.vector_store %arg2[%c0_2, %c0_3], %8 {strides = array<i32>} : memref<256x128xf32, #tpu.memory_space<vmem>>, vector<256x128xf32>,
    %10 = arith.truncf %8 : vector<256x128xf32> to vector<256x128xbf16>
    %c0_4 = arith.constant 0 : index
    %c0_5 = arith.constant 0 : index
    %11 = vector.load %arg3[%c0_4, %c0_5] : memref<256x128xbf16, #tpu.memory_space<vmem>>, vector<256x128xbf16>
    tpu.vector_store %arg3[%c0_4, %c0_5], %10 {strides = array<i32>} : memref<256x128xbf16, #tpu.memory_space<vmem>>, vector<256x128xbf16>,
    return
  }
  func.func @transform_0(%arg0: i32) -> (i32, i32) {
    %c0_i32 = arith.constant 0 : i32
    %c0_i32_0 = arith.constant 0 : i32
    return %c0_i32, %arg0 : i32, i32
  }
  func.func @transform_1(%arg0: i32) -> (i32, i32) {
    %c0_i32 = arith.constant 0 : i32
    %c0_i32_0 = arith.constant 0 : i32
    return %c0_i32, %arg0 : i32, i32
  }
  func.func @transform_2(%arg0: i32) -> (i32, i32) {
    %c0_i32 = arith.constant 0 : i32
    %c0_i32_0 = arith.constant 0 : i32
    return %c0_i32, %arg0 : i32, i32
  }
}

</mosaic_0001>

<llo_original>
// kernel: tpu_custom_call.1
$region0: #{tpu_custom_call.1}
  #allocation0 [shape = 'u32[]', space=smem, size = 0x4, offset = 0x4, fixed_abs, tag = 'smem constant byte address 0x4 - core index']
  #allocation1 [shape = 'u32[72,128]{1,0:T(1,128)}', space=vmem, size = 0x9000, scoped, tag = 'internal scratch']
  %s0 = inlined_call_operand.hbm [shape: f32[256,128], index: 0, kind: input, shape index: {}]
  %s1 = inlined_call_operand.hbm [shape: f32[256,128], index: 1, kind: output, shape index: {0}]
  %s2 = inlined_call_operand.hbm [shape: bf16[256,128], index: 2, kind: output, shape index: {1}]
  %3 = xla_tuple %s1, %s2
  %s4 = sld [smem:[#allocation0]]
  $region26: #{tpu_custom_call.1} parent=0
    _
  %s6 = ssub.s32 1, %s4
  %s7 = scalar_select 0, %s6, %s4
  $region1: #{tpu_custom_call.1} parent=0
    #allocation2 [shape = 'u8[131072]{0}', space=vmem, size = 0x20000, scoped, tag = 'input window, operand 0, single buffered']
    #allocation3 [shape = 's32[1]{0}', space=sflag, size = 0x4, scoped, tag = 'scoped memory for tpu_custom_call.1']
    #allocation4 [shape = 's32[1]{0}', space=sflag, size = 0x4, scoped, tag = 'scoped memory for tpu_custom_call.1']
    #allocation5 [shape = 'u8[131072]{0}', space=vmem, size = 0x20000, scoped, tag = 'output window, operand 0, single buffered']
    #allocation6 [shape = 'u8[65536]{0}', space=vmem, size = 0x10000, scoped, tag = 'output window, operand 1, single buffered']
    #allocation7 [shape = 's32[1]{0}', space=sflag, size = 0x4, scoped, tag = 'scoped memory for tpu_custom_call.1']
    %8 = vsyncpa [#allocation3], 0
    %9 = vsyncpa [#allocation4], 0
    %10 = vsyncpa [#allocation7], 0
    // Predicated region
    $region2: #{tpu_custom_call.1} parent=1 // pred_check
      _
    $region3: #{tpu_custom_call.1} parent=1 // pred_check_branch
      %12 = sbr.rel (0) target = $region5
    $region4: #{tpu_custom_call.1} parent=1 // pred_region
      %14 = vsyncadd [#allocation3], 0
      %s15 = sshll.u32 %s0, 4
      %s16 = int_to_ptr.hbm [resolvable:$true] %s15
      %s17 = sshll.u32 [#allocation2], 4
      %s18 = int_to_ptr.vmem [resolvable:$true] %s17
      %23 = dma.hbm_to_vmem [thread:$0]  %s16, 4096, %s18, [#allocation3], 128, 128, 8
    $region5: #{tpu_custom_call.1} parent=1 // pred_fallthru
      _
    // Predicated region
    $region6: #{tpu_custom_call.1} parent=1 // pred_check
      _
    $region7: #{tpu_custom_call.1} parent=1 // pred_check_branch
      %25 = sbr.rel (0) target = $region9
    $region8: #{tpu_custom_call.1} parent=1 // pred_region
      %27 = dma.done [#allocation3], 4096
    $region9: #{tpu_custom_call.1} parent=1 // pred_fallthru
      _
    %v28 = vld [vmem:[#allocation2] sm:$0xff]
    %v29 = vld [vmem:[#allocation2 + $0x8] sm:$0xff]
    %v30 = vld [vmem:[#allocation2 + $0x10] sm:$0xff]
    %v31 = vld [vmem:[#allocation2 + $0x18] sm:$0xff]
    %v32 = vld [vmem:[#allocation2 + $0x20] sm:$0xff]
    %v33 = vld [vmem:[#allocation2 + $0x28] sm:$0xff]
    %v34 = vld [vmem:[#allocation2 + $0x30] sm:$0xff]
    %v35 = vld [vmem:[#allocation2 + $0x38] sm:$0xff]
    %v36 = vld [vmem:[#allocation2 + $0x40] sm:$0xff]
    %v37 = vld [vmem:[#allocation2 + $0x48] sm:$0xff]
    %v38 = vld [vmem:[#allocation2 + $0x50] sm:$0xff]
    %v39 = vld [vmem:[#allocation2 + $0x58] sm:$0xff]
    %v40 = vld [vmem:[#allocation2 + $0x60] sm:$0xff]
    %v41 = vld [vmem:[#allocation2 + $0x68] sm:$0xff]
    %v42 = vld [vmem:[#allocation2 + $0x70] sm:$0xff]
    %v43 = vld [vmem:[#allocation2 + $0x78] sm:$0xff]
    %v44 = vld [vmem:[#allocation2 + $0x80] sm:$0xff]
    %v45 = vld [vmem:[#allocation2 + $0x88] sm:$0xff]
    %v46 = vld [vmem:[#allocation2 + $0x90] sm:$0xff]
    %v47 = vld [vmem:[#allocation2 + $0x98] sm:$0xff]
    %v48 = vld [vmem:[#allocation2 + $0xa0] sm:$0xff]
    %v49 = vld [vmem:[#allocation2 + $0xa8] sm:$0xff]
    %v50 = vld [vmem:[#allocation2 + $0xb0] sm:$0xff]
    %v51 = vld [vmem:[#allocation2 + $0xb8] sm:$0xff]
    %v52 = vld [vmem:[#allocation2 + $0xc0] sm:$0xff]
    %v53 = vld [vmem:[#allocation2 + $0xc8] sm:$0xff]
    %v54 = vld [vmem:[#allocation2 + $0xd0] sm:$0xff]
    %v55 = vld [vmem:[#allocation2 + $0xd8] sm:$0xff]
    %v56 = vld [vmem:[#allocation2 + $0xe0] sm:$0xff]
    %v57 = vld [vmem:[#allocation2 + $0xe8] sm:$0xff]
    %v58 = vld [vmem:[#allocation2 + $0xf0] sm:$0xff]
    %v59 = vld [vmem:[#allocation2 + $0xf8] sm:$0xff]
    %v60 = vmul.f32 %v28, %v28
    %v61 = vmul.f32 %v29, %v29
    %v62 = vmul.f32 %v30, %v30
    %v63 = vmul.f32 %v31, %v31
    %v64 = vmul.f32 %v32, %v32
    %v65 = vmul.f32 %v33, %v33
    %v66 = vmul.f32 %v34, %v34
    %v67 = vmul.f32 %v35, %v35
    %v68 = vmul.f32 %v36, %v36
    %v69 = vmul.f32 %v37, %v37
    %v70 = vmul.f32 %v38, %v38
    %v71 = vmul.f32 %v39, %v39
    %v72 = vmul.f32 %v40, %v40
    %v73 = vmul.f32 %v41, %v41
    %v74 = vmul.f32 %v42, %v42
    %v75 = vmul.f32 %v43, %v43
    %v76 = vmul.f32 %v44, %v44
    %v77 = vmul.f32 %v45, %v45
    %v78 = vmul.f32 %v46, %v46
    %v79 = vmul.f32 %v47, %v47
    %v80 = vmul.f32 %v48, %v48
    %v81 = vmul.f32 %v49, %v49
    %v82 = vmul.f32 %v50, %v50
    %v83 = vmul.f32 %v51, %v51
    %v84 = vmul.f32 %v52, %v52
    %v85 = vmul.f32 %v53, %v53
    %v86 = vmul.f32 %v54, %v54
    %v87 = vmul.f32 %v55, %v55
    %v88 = vmul.f32 %v56, %v56
    %v89 = vmul.f32 %v57, %v57
    %v90 = vmul.f32 %v58, %v58
    %v91 = vmul.f32 %v59, %v59
    %v92 = vadd.f32 %v60, %v61
    %v93 = vadd.f32 %v92, %v62
    %v94 = vadd.f32 %v93, %v63
    %v95 = vadd.f32 %v94, %v64
    %v96 = vadd.f32 %v95, %v65
    %v97 = vadd.f32 %v96, %v66
    %v98 = vadd.f32 %v97, %v67
    %v99 = vadd.f32 %v98, %v68
    %v100 = vadd.f32 %v99, %v69
    %v101 = vadd.f32 %v100, %v70
    %v102 = vadd.f32 %v101, %v71
    %v103 = vadd.f32 %v102, %v72
    %v104 = vadd.f32 %v103, %v73
    %v105 = vadd.f32 %v104, %v74
    %v106 = vadd.f32 %v105, %v75
    %v107 = vadd.f32 %v106, %v76
    %v108 = vadd.f32 %v107, %v77
    %v109 = vadd.f32 %v108, %v78
    %v110 = vadd.f32 %v109, %v79
    %v111 = vadd.f32 %v110, %v80
    %v112 = vadd.f32 %v111, %v81
    %v113 = vadd.f32 %v112, %v82
    %v114 = vadd.f32 %v113, %v83
    %v115 = vadd.f32 %v114, %v84
    %v116 = vadd.f32 %v115, %v85
    %v117 = vadd.f32 %v116, %v86
    %v118 = vadd.f32 %v117, %v87
    %v119 = vadd.f32 %v118, %v88
    %v120 = vadd.f32 %v119, %v89
    %v121 = vadd.f32 %v120, %v90
    %v122 = vadd.f32 %v121, %v91
    %v123 = vrot.slane %v122, 4
    %v124 = vadd.f32 %v122, %v123
    %v125 = vrot.slane %v124, 2
    %v126 = vadd.f32 %v124, %v125
    %v127 = vrot.slane %v126, 1
    %v128 = vadd.f32 %v126, %v127
    %v129 = vmax.f32 %v128, 1e-24
    %v130 = vrsqrt.pop %v129
    %v131 = vmul.f32 %v130, %v129
    %v132 = vmul.f32 %v131, %v130
    %v133 = vmul.f32 0.5, %v132
    %v134 = vsub.f32 1.5, %v133
    %v135 = vmul.f32 %v130, %v134
    %vm136 = vweird.f32 %v129
    %vm137 = vweird.f32 %v130
    %vm138 = vmor %vm136, %vm137
    %v139 = vsel %vm138, %v130, %v135
    %v140 = vmul.f32 %v28, %v139
    %v141 = vmul.f32 %v29, %v139
    %v142 = vmul.f32 %v30, %v139
    %v143 = vmul.f32 %v31, %v139
    %v144 = vmul.f32 %v32, %v139
    %v145 = vmul.f32 %v33, %v139
    %v146 = vmul.f32 %v34, %v139
    %v147 = vmul.f32 %v35, %v139
    %v148 = vmul.f32 %v36, %v139
    %v149 = vmul.f32 %v37, %v139
    %v150 = vmul.f32 %v38, %v139
    %v151 = vmul.f32 %v39, %v139
    %v152 = vmul.f32 %v40, %v139
    %v153 = vmul.f32 %v41, %v139
    %v154 = vmul.f32 %v42, %v139
    %v155 = vmul.f32 %v43, %v139
    %v156 = vmul.f32 %v44, %v139
    %v157 = vmul.f32 %v45, %v139
    %v158 = vmul.f32 %v46, %v139
    %v159 = vmul.f32 %v47, %v139
    %v160 = vmul.f32 %v48, %v139
    %v161 = vmul.f32 %v49, %v139
    %v162 = vmul.f32 %v50, %v139
    %v163 = vmul.f32 %v51, %v139
    %v164 = vmul.f32 %v52, %v139
    %v165 = vmul.f32 %v53, %v139
    %v166 = vmul.f32 %v54, %v139
    %v167 = vmul.f32 %v55, %v139
    %v168 = vmul.f32 %v56, %v139
    %v169 = vmul.f32 %v57, %v139
    %v170 = vmul.f32 %v58, %v139
    %v171 = vmul.f32 %v59, %v139
    %172 = vst [vmem:[#allocation5] sm:$0xff] %v140
    %173 = vst [vmem:[#allocation5 + $0x8] sm:$0xff] %v141
    %174 = vst [vmem:[#allocation5 + $0x10] sm:$0xff] %v142
    %175 = vst [vmem:[#allocation5 + $0x18] sm:$0xff] %v143
    %176 = vst [vmem:[#allocation5 + $0x20] sm:$0xff] %v144
    %177 = vst [vmem:[#allocation5 + $0x28] sm:$0xff] %v145
    %178 = vst [vmem:[#allocation5 + $0x30] sm:$0xff] %v146
    %179 = vst [vmem:[#allocation5 + $0x38] sm:$0xff] %v147
    %180 = vst [vmem:[#allocation5 + $0x40] sm:$0xff] %v148
    %181 = vst [vmem:[#allocation5 + $0x48] sm:$0xff] %v149
    %182 = vst [vmem:[#allocation5 + $0x50] sm:$0xff] %v150
    %183 = vst [vmem:[#allocation5 + $0x58] sm:$0xff] %v151
    %184 = vst [vmem:[#allocation5 + $0x60] sm:$0xff] %v152
    %185 = vst [vmem:[#allocation5 + $0x68] sm:$0xff] %v153
    %186 = vst [vmem:[#allocation5 + $0x70] sm:$0xff] %v154
    %187 = vst [vmem:[#allocation5 + $0x78] sm:$0xff] %v155
    %188 = vst [vmem:[#allocation5 + $0x80] sm:$0xff] %v156
    %189 = vst [vmem:[#allocation5 + $0x88] sm:$0xff] %v157
    %190 = vst [vmem:[#allocation5 + $0x90] sm:$0xff] %v158
    %191 = vst [vmem:[#allocation5 + $0x98] sm:$0xff] %v159
    %192 = vst [vmem:[#allocation5 + $0xa0] sm:$0xff] %v160
    %193 = vst [vmem:[#allocation5 + $0xa8] sm:$0xff] %v161
    %194 = vst [vmem:[#allocation5 + $0xb0] sm:$0xff] %v162
    %195 = vst [vmem:[#allocation5 + $0xb8] sm:$0xff] %v163
    %196 = vst [vmem:[#allocation5 + $0xc0] sm:$0xff] %v164
    %197 = vst [vmem:[#allocation5 + $0xc8] sm:$0xff] %v165
    %198 = vst [vmem:[#allocation5 + $0xd0] sm:$0xff] %v166
    %199 = vst [vmem:[#allocation5 + $0xd8] sm:$0xff] %v167
    %200 = vst [vmem:[#allocation5 + $0xe0] sm:$0xff] %v168
    %201 = vst [vmem:[#allocation5 + $0xe8] sm:$0xff] %v169
    %202 = vst [vmem:[#allocation5 + $0xf0] sm:$0xff] %v170
    %203 = vst [vmem:[#allocation5 + $0xf8] sm:$0xff] %v171
    %v204 = vpack.c.bf16 %v140, %v140
    %v205 = vpack.c.bf16 %v141, %v141
    %v206 = vpack.c.bf16 %v142, %v142
    %v207 = vpack.c.bf16 %v143, %v143
    %v208 = vpack.c.bf16 %v144, %v144
    %v209 = vpack.c.bf16 %v145, %v145
    %v210 = vpack.c.bf16 %v146, %v146
    %v211 = vpack.c.bf16 %v147, %v147
    %v212 = vpack.c.bf16 %v148, %v148
    %v213 = vpack.c.bf16 %v149, %v149
    %v214 = vpack.c.bf16 %v150, %v150
    %v215 = vpack.c.bf16 %v151, %v151
    %v216 = vpack.c.bf16 %v152, %v152
    %v217 = vpack.c.bf16 %v153, %v153
    %v218 = vpack.c.bf16 %v154, %v154
    %v219 = vpack.c.bf16 %v155, %v155
    %v220 = vpack.c.bf16 %v156, %v156
    %v221 = vpack.c.bf16 %v157, %v157
    %v222 = vpack.c.bf16 %v158, %v158
    %v223 = vpack.c.bf16 %v159, %v159
    %v224 = vpack.c.bf16 %v160, %v160
    %v225 = vpack.c.bf16 %v161, %v161
    %v226 = vpack.c.bf16 %v162, %v162
    %v227 = vpack.c.bf16 %v163, %v163
    %v228 = vpack.c.bf16 %v164, %v164
    %v229 = vpack.c.bf16 %v165, %v165
    %v230 = vpack.c.bf16 %v166, %v166
    %v231 = vpack.c.bf16 %v167, %v167
    %v232 = vpack.c.bf16 %v168, %v168
    %v233 = vpack.c.bf16 %v169, %v169
    %v234 = vpack.c.bf16 %v170, %v170
    %v235 = vpack.c.bf16 %v171, %v171
    %236 = vst [vmem:[#allocation6] sm:$0xf] %v204
    %237 = vst [vmem:[#allocation6 + $0x4] sm:$0xf] %v205
    %238 = vst [vmem:[#allocation6 + $0x8] sm:$0xf] %v206
    %239 = vst [vmem:[#allocation6 + $0xc] sm:$0xf] %v207
    %240 = vst [vmem:[#allocation6 + $0x10] sm:$0xf] %v208
    %241 = vst [vmem:[#allocation6 + $0x14] sm:$0xf] %v209
    %242 = vst [vmem:[#allocation6 + $0x18] sm:$0xf] %v210
    %243 = vst [vmem:[#allocation6 + $0x1c] sm:$0xf] %v211
    %244 = vst [vmem:[#allocation6 + $0x20] sm:$0xf] %v212
    %245 = vst [vmem:[#allocation6 + $0x24] sm:$0xf] %v213
    %246 = vst [vmem:[#allocation6 + $0x28] sm:$0xf] %v214
    %247 = vst [vmem:[#allocation6 + $0x2c] sm:$0xf] %v215
    %248 = vst [vmem:[#allocation6 + $0x30] sm:$0xf] %v216
    %249 = vst [vmem:[#allocation6 + $0x34] sm:$0xf] %v217
    %250 = vst [vmem:[#allocation6 + $0x38] sm:$0xf] %v218
    %251 = vst [vmem:[#allocation6 + $0x3c] sm:$0xf] %v219
    %252 = vst [vmem:[#allocation6 + $0x40] sm:$0xf] %v220
    %253 = vst [vmem:[#allocation6 + $0x44] sm:$0xf] %v221
    %254 = vst [vmem:[#allocation6 + $0x48] sm:$0xf] %v222
    %255 = vst [vmem:[#allocation6 + $0x4c] sm:$0xf] %v223
    %256 = vst [vmem:[#allocation6 + $0x50] sm:$0xf] %v224
    %257 = vst [vmem:[#allocation6 + $0x54] sm:$0xf] %v225
    %258 = vst [vmem:[#allocation6 + $0x58] sm:$0xf] %v226
    %259 = vst [vmem:[#allocation6 + $0x5c] sm:$0xf] %v227
    %260 = vst [vmem:[#allocation6 + $0x60] sm:$0xf] %v228
    %261 = vst [vmem:[#allocation6 + $0x64] sm:$0xf] %v229
    %262 = vst [vmem:[#allocation6 + $0x68] sm:$0xf] %v230
    %263 = vst [vmem:[#allocation6 + $0x6c] sm:$0xf] %v231
    %264 = vst [vmem:[#allocation6 + $0x70] sm:$0xf] %v232
    %265 = vst [vmem:[#allocation6 + $0x74] sm:$0xf] %v233
    %266 = vst [vmem:[#allocation6 + $0x78] sm:$0xf] %v234
    %267 = vst [vmem:[#allocation6 + $0x7c] sm:$0xf] %v235
    // Predicated region
    $region10: #{tpu_custom_call.1} parent=1 // pred_check
      _
    $region11: #{tpu_custom_call.1} parent=1 // pred_check_branch
      %269 = sbr.rel (0) target = $region13
    $region12: #{tpu_custom_call.1} parent=1 // pred_region
      %271 = vsyncadd [#allocation4], 0
      %s272 = sshll.u32 [#allocation5], 4
      %s273 = int_to_ptr.vmem [resolvable:$true] %s272
      %s274 = sshll.u32 %s1, 4
      %s275 = int_to_ptr.hbm [resolvable:$true] %s274
      %280 = dma.vmem_to_hbm [thread:$0]  %s273, 4096, %s275, [#allocation4], 128, 128, 8
    $region13: #{tpu_custom_call.1} parent=1 // pred_fallthru
      _
    // Predicated region
    $region14: #{tpu_custom_call.1} parent=1 // pred_check
      _
    $region15: #{tpu_custom_call.1} parent=1 // pred_check_branch
      %282 = sbr.rel (0) target = $region17
    $region16: #{tpu_custom_call.1} parent=1 // pred_region
      %284 = vsyncadd [#allocation7], 0
      %s285 = sshll.u32 [#allocation6], 4
      %s286 = int_to_ptr.vmem [resolvable:$true] %s285
      %s287 = sshll.u32 %s2, 4
      %s288 = int_to_ptr.hbm [resolvable:$true] %s287
      %293 = dma.vmem_to_hbm [thread:$0]  %s286, 2048, %s288, [#allocation7], 64, 64, 4
    $region17: #{tpu_custom_call.1} parent=1 // pred_fallthru
      _
    // Predicated region
    $region18: #{tpu_custom_call.1} parent=1 // pred_check
      _
    $region19: #{tpu_custom_call.1} parent=1 // pred_check_branch
      %295 = sbr.rel (0) target = $region21
    $region20: #{tpu_custom_call.1} parent=1 // pred_region
      %297 = dma.done [#allocation4], 4096
    $region21: #{tpu_custom_call.1} parent=1 // pred_fallthru
      _
    // Predicated region
    $region22: #{tpu_custom_call.1} parent=1 // pred_check
      _
    $region23: #{tpu_custom_call.1} parent=1 // pred_check_branch
      %299 = sbr.rel (0) target = $region25
    $region24: #{tpu_custom_call.1} parent=1 // pred_region
      %301 = dma.done [#allocation7], 2048
    $region25: #{tpu_custom_call.1} parent=1 // pred_fallthru
      _
    %302 = vsyncpa [#allocation3], 1
    %303 = vsyncpa [#allocation4], 1
    %304 = vsyncpa [#allocation7], 1

</llo_original>
